<compile_context>
chip_gen: v7x
topology: tpu7x:2x2x1
jax: 0.10.0
libtpu: 0.0.40
codegen_flags: <defaults>
</compile_context>

<pallas_src>
import functools
import math

import jax
import jax.numpy as jnp
from jax.experimental import pallas as pl
from jax.experimental.pallas import tpu as pltpu  # noqa: F401  (kept for parity / future tuning)


# --------------- fused ConvTranspose2d(k=2,s=2) + BatchNorm + ReLU ---------------
def _deconv_bn_relu_kernel(x_ref, w_ref, b_ref, g_ref, be_ref, o_ref,
                           *, N, H, W, Cin, Cout):
    M = N * H * W
    C2 = 2 * Cout

    x2d = x_ref[...].reshape(M, Cin)                       # bf16, rows = (n, h, w)
    b2 = b_ref[...]                                        # (1, 2*Cout) f32, cols = (dw, co)

    # Two MXU matmuls (one per output-row parity dh), f32 accumulation.
    y0 = jnp.dot(x2d, w_ref[0], preferred_element_type=jnp.float32) + b2   # (M, 2*Cout)
    y1 = jnp.dot(x2d, w_ref[1], preferred_element_type=jnp.float32) + b2   # (M, 2*Cout)

    # ---- training-mode BatchNorm stats over all N*(2H)*(2W) = 4*M samples / channel ----
    inv_n = 1.0 / (4.0 * M)
    s = jnp.sum(y0, axis=0, keepdims=True) + jnp.sum(y1, axis=0, keepdims=True)   # (1, 2C)
    mean = (s[:, :Cout] + s[:, Cout:]) * inv_n                                     # (1, C)
    mean2 = jnp.concatenate([mean, mean], axis=1)                                  # (1, 2C)

    d0 = y0 - mean2
    d1 = y1 - mean2
    sq = jnp.sum(d0 * d0, axis=0, keepdims=True) + jnp.sum(d1 * d1, axis=0, keepdims=True)
    var = (sq[:, :Cout] + sq[:, Cout:]) * inv_n                                    # biased var (1, C)

    scale = g_ref[...] * jax.lax.rsqrt(var + 1e-5)                                 # (1, C)
    scale2 = jnp.concatenate([scale, scale], axis=1)                               # (1, 2C)
    shift2 = jnp.concatenate([be_ref[...], be_ref[...]], axis=1)                   # (1, 2C)

    out0 = jnp.maximum(d0 * scale2 + shift2, 0.0)
    out1 = jnp.maximum(d1 * scale2 + shift2, 0.0)

    # In-kernel pixel shuffle: o_ref is (N, H, 2, W, 2*Cout) == row-major (N, 2H, 2W, Cout).
    o_ref[:, :, pl.ds(0, 1), :, :] = out0.reshape(N, H, 1, W, C2)
    o_ref[:, :, pl.ds(1, 1), :, :] = out1.reshape(N, H, 1, W, C2)


def deconv2d_bn(x_nchw, w, b, gamma, beta):
    """ReLU(BN(ConvTranspose2d(x))) with kernel=2, stride=2.

    x_nchw: (N, Cin, H, W) f32 (PyTorch layout)
    w:      (Cin, Cout, 2, 2) f32 (PyTorch ConvTranspose2d layout)
    b, gamma, beta: (Cout,) f32
    returns (N, Cout, 2H, 2W) f32
    """
    N, Cin, H, W = x_nchw.shape
    assert w.shape[0] == Cin and w.shape[2:] == (2, 2), "module uses kernel=2, stride=2"
    Cout = w.shape[1]

    # Layout / dtype prep at the boundary (XLA): NCHW -> NHWC, bf16 for the MXU.
    x = jnp.transpose(x_nchw, (0, 2, 3, 1)).astype(jnp.bfloat16)            # (N, H, W, Cin)
    # (Cin, Cout, dh, dw) -> (dh, Cin, dw*Cout): per-dh matmul weight, cols ordered (dw, co).
    wp = jnp.transpose(w, (2, 0, 3, 1)).reshape(2, Cin, 2 * Cout).astype(jnp.bfloat16)
    b2 = jnp.tile(b.astype(jnp.float32), 2).reshape(1, 2 * Cout)            # cols = (dw, co)

    kern = functools.partial(_deconv_bn_relu_kernel, N=N, H=H, W=W, Cin=Cin, Cout=Cout)
    y = pl.pallas_call(
        kern,
        out_shape=jax.ShapeDtypeStruct((N, H, 2, W, 2 * Cout), jnp.float32),
    )(x, wp, b2,
      gamma.astype(jnp.float32).reshape(1, Cout),
      beta.astype(jnp.float32).reshape(1, Cout))

    # Metadata-only reshape: (N, H, 2, W, 2*Cout) is exactly row-major (N, 2H, 2W, Cout).
    y = y.reshape(N, 2 * H, 2 * W, Cout)
    return jnp.transpose(y, (0, 3, 1, 2))                                   # NHWC -> NCHW


# ------------------------------- pure-JAX reference ------------------------------
def _reference(x_nchw, w, b, gamma, beta):
    N, Cin, H, W = x_nchw.shape
    Cout = w.shape[1]
    # ConvTranspose2d k=2 s=2: out[n, co, 2h+dh, 2w+dw] = sum_ci x[n,ci,h,w] * w[ci,co,dh,dw]
    y = jnp.einsum("nihw,iodv->nohdwv", x_nchw, w).reshape(N, Cout, 2 * H, 2 * W)
    y = y + b[None, :, None, None]
    mean = jnp.mean(y, axis=(0, 2, 3), keepdims=True)
    var = jnp.mean(jnp.square(y - mean), axis=(0, 2, 3), keepdims=True)     # biased variance
    yn = (y - mean) * jax.lax.rsqrt(var + 1e-5)
    yn = yn * gamma[None, :, None, None] + beta[None, :, None, None]
    return jnp.maximum(yn, 0.0)


if __name__ == "__main__":
    key = jax.random.PRNGKey(0)
    kx, kw, kb = jax.random.split(key, 3)

    N, Cin, Cout, H, W = 2, 128, 64, 8, 8                                   # UNet deconv1 sizes
    x = jax.random.normal(kx, (N, Cin, H, W), jnp.float32)
    bound = 1.0 / math.sqrt(Cin * 2 * 2)                                    # PyTorch default init
    w = jax.random.uniform(kw, (Cin, Cout, 2, 2), jnp.float32, -bound, bound)
    b = jax.random.uniform(kb, (Cout,), jnp.float32, -bound, bound)
    gamma = jnp.ones((Cout,), jnp.float32)                                  # BN default init
    beta = jnp.zeros((Cout,), jnp.float32)

    out = deconv2d_bn(x, w, b, gamma, beta)
    out = jax.block_until_ready(out)
    assert out.shape == (N, Cout, 2 * H, 2 * W), out.shape
    assert bool(jnp.all(jnp.isfinite(out)))

    ref = _reference(x, w, b, gamma, beta)
    err = float(jnp.max(jnp.abs(out - ref)))
    assert err < 8e-2, f"max |out - ref| = {err}"                           # bf16 matmul tolerance
    print("KERNEL_OK")
</pallas_src>

<mosaic_0001>
module attributes {stable_mosaic.version = 11 : i64} {
  func.func @_deconv_bn_relu_kernel(%arg0: memref<2x8x8x128xbf16, #tpu.memory_space<vmem>>, %arg1: memref<2x128x128xbf16, #tpu.memory_space<vmem>>, %arg2: memref<1x128xf32, #tpu.memory_space<vmem>>, %arg3: memref<1x64xf32, #tpu.memory_space<vmem>>, %arg4: memref<1x64xf32, #tpu.memory_space<vmem>>, %arg5: memref<2x8x2x8x128xf32, #tpu.memory_space<vmem>>) attributes {dimension_semantics = [], scalar_prefetch = 0 : i64, scratch_operands = 0 : i64, tpu.core_type = #tpu.core_type<tc>} {
    %c0 = arith.constant 0 : index
    %c0_0 = arith.constant 0 : index
    %c0_1 = arith.constant 0 : index
    %c0_2 = arith.constant 0 : index
    %0 = vector.load %arg0[%c0, %c0_0, %c0_1, %c0_2] : memref<2x8x8x128xbf16, #tpu.memory_space<vmem>>, vector<2x8x8x128xbf16>
    %1 = vector.shape_cast %0 : vector<2x8x8x128xbf16> to vector<128x128xbf16>
    %c0_3 = arith.constant 0 : index
    %c0_4 = arith.constant 0 : index
    %2 = vector.load %arg2[%c0_3, %c0_4] : memref<1x128xf32, #tpu.memory_space<vmem>>, vector<1x128xf32>
    %c0_5 = arith.constant 0 : index
    %c0_6 = arith.constant 0 : index
    %c0_7 = arith.constant 0 : index
    %3 = vector.load %arg1[%c0_5, %c0_6, %c0_7] : memref<2x128x128xbf16, #tpu.memory_space<vmem>>, vector<1x128x128xbf16>
    %4 = vector.shape_cast %3 : vector<1x128x128xbf16> to vector<128x128xbf16>
    %cst = arith.constant dense<0.000000e+00> : vector<128x128xf32>
    %5 = tpu.matmul %1, %4, %cst {dimension_numbers = #tpu.dot_dimension_numbers<[1], [0], [0], [1], [0, 0, 1, 1], [], []>} : vector<128x128xbf16>, vector<128x128xbf16>, vector<128x128xf32> -> vector<128x128xf32>
    %6 = vector.broadcast %2 : vector<1x128xf32> to vector<128x128xf32>
    %7 = arith.addf %5, %6 : vector<128x128xf32>
    %c1 = arith.constant 1 : index
    %c0_8 = arith.constant 0 : index
    %c0_9 = arith.constant 0 : index
    %8 = vector.load %arg1[%c1, %c0_8, %c0_9] : memref<2x128x128xbf16, #tpu.memory_space<vmem>>, vector<1x128x128xbf16>
    %9 = vector.shape_cast %8 : vector<1x128x128xbf16> to vector<128x128xbf16>
    %cst_10 = arith.constant dense<0.000000e+00> : vector<128x128xf32>
    %10 = tpu.matmul %1, %9, %cst_10 {dimension_numbers = #tpu.dot_dimension_numbers<[1], [0], [0], [1], [0, 0, 1, 1], [], []>} : vector<128x128xbf16>, vector<128x128xbf16>, vector<128x128xf32> -> vector<128x128xf32>
    %11 = vector.broadcast %2 : vector<1x128xf32> to vector<128x128xf32>
    %12 = arith.addf %10, %11 : vector<128x128xf32>
    %cst_11 = arith.constant dense<0.000000e+00> : vector<128xf32>
    %13 = vector.multi_reduction <add>, %7, %cst_11 [0] : vector<128x128xf32> to vector<128xf32>
    %14 = vector.shape_cast %13 : vector<128xf32> to vector<1x128xf32>
    %cst_12 = arith.constant dense<0.000000e+00> : vector<128xf32>
    %15 = vector.multi_reduction <add>, %12, %cst_12 [0] : vector<128x128xf32> to vector<128xf32>
    %16 = vector.shape_cast %15 : vector<128xf32> to vector<1x128xf32>
    %17 = arith.addf %14, %16 : vector<1x128xf32>
    %18 = vector.extract_strided_slice %17 {offsets = [0, 0], sizes = [1, 64], strides = [1, 1]} : vector<1x128xf32> to vector<1x64xf32>
    %19 = vector.extract_strided_slice %17 {offsets = [0, 64], sizes = [1, 64], strides = [1, 1]} : vector<1x128xf32> to vector<1x64xf32>
    %20 = arith.addf %18, %19 : vector<1x64xf32>
    %cst_13 = arith.constant 0.001953125 : f32
    %21 = vector.broadcast %cst_13 : f32 to vector<1x64xf32>
    %22 = arith.mulf %20, %21 : vector<1x64xf32>
    %23 = tpu.concatenate %22, %22 in 1 : vector<1x64xf32>, vector<1x64xf32> -> vector<1x128xf32>
    %24 = vector.broadcast %23 : vector<1x128xf32> to vector<128x128xf32>
    %25 = arith.subf %7, %24 : vector<128x128xf32>
    %26 = vector.broadcast %23 : vector<1x128xf32> to vector<128x128xf32>
    %27 = arith.subf %12, %26 : vector<128x128xf32>
    %28 = arith.mulf %25, %25 : vector<128x128xf32>
    %cst_14 = arith.constant dense<0.000000e+00> : vector<128xf32>
    %29 = vector.multi_reduction <add>, %28, %cst_14 [0] : vector<128x128xf32> to vector<128xf32>
    %30 = vector.shape_cast %29 : vector<128xf32> to vector<1x128xf32>
    %31 = arith.mulf %27, %27 : vector<128x128xf32>
    %cst_15 = arith.constant dense<0.000000e+00> : vector<128xf32>
    %32 = vector.multi_reduction <add>, %31, %cst_15 [0] : vector<128x128xf32> to vector<128xf32>
    %33 = vector.shape_cast %32 : vector<128xf32> to vector<1x128xf32>
    %34 = arith.addf %30, %33 : vector<1x128xf32>
    %35 = vector.extract_strided_slice %34 {offsets = [0, 0], sizes = [1, 64], strides = [1, 1]} : vector<1x128xf32> to vector<1x64xf32>
    %36 = vector.extract_strided_slice %34 {offsets = [0, 64], sizes = [1, 64], strides = [1, 1]} : vector<1x128xf32> to vector<1x64xf32>
    %37 = arith.addf %35, %36 : vector<1x64xf32>
    %cst_16 = arith.constant 0.001953125 : f32
    %38 = vector.broadcast %cst_16 : f32 to vector<1x64xf32>
    %39 = arith.mulf %37, %38 : vector<1x64xf32>
    %c0_17 = arith.constant 0 : index
    %c0_18 = arith.constant 0 : index
    %40 = vector.load %arg3[%c0_17, %c0_18] : memref<1x64xf32, #tpu.memory_space<vmem>>, vector<1x64xf32>
    %cst_19 = arith.constant 9.99999974E-6 : f32
    %41 = vector.broadcast %cst_19 : f32 to vector<1x64xf32>
    %42 = arith.addf %39, %41 : vector<1x64xf32>
    %43 = math.rsqrt %42 : vector<1x64xf32>
    %44 = arith.mulf %40, %43 : vector<1x64xf32>
    %45 = tpu.concatenate %44, %44 in 1 : vector<1x64xf32>, vector<1x64xf32> -> vector<1x128xf32>
    %c0_20 = arith.constant 0 : index
    %c0_21 = arith.constant 0 : index
    %46 = vector.load %arg4[%c0_20, %c0_21] : memref<1x64xf32, #tpu.memory_space<vmem>>, vector<1x64xf32>
    %c0_22 = arith.constant 0 : index
    %c0_23 = arith.constant 0 : index
    %47 = vector.load %arg4[%c0_22, %c0_23] : memref<1x64xf32, #tpu.memory_space<vmem>>, vector<1x64xf32>
    %48 = tpu.concatenate %46, %47 in 1 : vector<1x64xf32>, vector<1x64xf32> -> vector<1x128xf32>
    %49 = vector.broadcast %45 : vector<1x128xf32> to vector<128x128xf32>
    %50 = arith.mulf %25, %49 : vector<128x128xf32>
    %51 = vector.broadcast %48 : vector<1x128xf32> to vector<128x128xf32>
    %52 = arith.addf %50, %51 : vector<128x128xf32>
    %cst_24 = arith.constant 0.000000e+00 : f32
    %53 = vector.broadcast %cst_24 : f32 to vector<128x128xf32>
    %54 = arith.maximumf %52, %53 : vector<128x128xf32>
    %55 = vector.broadcast %45 : vector<1x128xf32> to vector<128x128xf32>
    %56 = arith.mulf %27, %55 : vector<128x128xf32>
    %57 = vector.broadcast %48 : vector<1x128xf32> to vector<128x128xf32>
    %58 = arith.addf %56, %57 : vector<128x128xf32>
    %cst_25 = arith.constant 0.000000e+00 : f32
    %59 = vector.broadcast %cst_25 : f32 to vector<128x128xf32>
    %60 = arith.maximumf %58, %59 : vector<128x128xf32>
    %61 = vector.shape_cast %54 : vector<128x128xf32> to vector<2x8x1x8x128xf32>
    %c0_26 = arith.constant 0 : index
    %c0_27 = arith.constant 0 : index
    %c0_28 = arith.constant 0 : index
    %c0_29 = arith.constant 0 : index
    %c0_30 = arith.constant 0 : index
    %62 = vector.load %arg5[%c0_26, %c0_27, %c0_28, %c0_29, %c0_30] : memref<2x8x2x8x128xf32, #tpu.memory_space<vmem>>, vector<2x8x1x8x128xf32>
    tpu.vector_store %arg5[%c0_26, %c0_27, %c0_28, %c0_29, %c0_30], %61 {strides = array<i32>} : memref<2x8x2x8x128xf32, #tpu.memory_space<vmem>>, vector<2x8x1x8x128xf32>,
    %63 = vector.shape_cast %60 : vector<128x128xf32> to vector<2x8x1x8x128xf32>
    %c0_31 = arith.constant 0 : index
    %c0_32 = arith.constant 0 : index
    %c1_33 = arith.constant 1 : index
    %c0_34 = arith.constant 0 : index
    %c0_35 = arith.constant 0 : index
    %64 = vector.load %arg5[%c0_31, %c0_32, %c1_33, %c0_34, %c0_35] : memref<2x8x2x8x128xf32, #tpu.memory_space<vmem>>, vector<2x8x1x8x128xf32>
    tpu.vector_store %arg5[%c0_31, %c0_32, %c1_33, %c0_34, %c0_35], %63 {strides = array<i32>} : memref<2x8x2x8x128xf32, #tpu.memory_space<vmem>>, vector<2x8x1x8x128xf32>,
    return
  }
}

</mosaic_0001>

<llo_original>
// kernel: tpu_custom_call.1
$region0: #{tpu_custom_call.1}
  #allocation0 [shape = 'u32[]', space=smem, size = 0x4, offset = 0x4, fixed_abs, tag = 'smem constant byte address 0x4 - core index']
  #allocation1 [shape = 'u32[144,128]{1,0:T(1,128)}', space=vmem, size = 0x12000, scoped, tag = 'internal scratch']
  %s0 = inlined_call_operand.hbm [shape: bf16[2,8,8,128], index: 0, kind: input, shape index: {}]
  %s1 = inlined_call_operand.hbm [shape: bf16[2,128,128], index: 1, kind: input, shape index: {}]
  %s2 = inlined_call_operand.vmem [shape: f32[1,128], index: 2, kind: input, shape index: {}]
  %s3 = inlined_call_operand.vmem [shape: f32[1,64], index: 3, kind: input, shape index: {}]
  %s4 = inlined_call_operand.vmem [shape: f32[1,64], index: 4, kind: input, shape index: {}]
  %s5 = inlined_call_operand.hbm [shape: f32[2,8,2,8,128], index: 5, kind: output, shape index: {}]
  %s6 = sld [smem:[#allocation0]]
  $region38: #{tpu_custom_call.1} parent=0
    _
  %s8 = ssub.s32 1, %s6
  %s9 = scalar_select 0, %s8, %s6
  $region1: #{tpu_custom_call.1} parent=0
    #allocation2 [shape = 'u8[32768]{0}', space=vmem, size = 0x8000, scoped, tag = 'input window, operand 0, single buffered']
    #allocation3 [shape = 's32[1]{0}', space=sflag, size = 0x4, scoped, tag = 'scoped memory for tpu_custom_call.1']
    #allocation4 [shape = 's32[1]{0}', space=sflag, size = 0x4, scoped, tag = 'scoped memory for tpu_custom_call.1']
    #allocation5 [shape = 'u8[65536]{0}', space=vmem, size = 0x10000, scoped, tag = 'input window, operand 1, single buffered']
    #allocation6 [shape = 's32[1]{0}', space=sflag, size = 0x4, scoped, tag = 'scoped memory for tpu_custom_call.1']
    #allocation7 [shape = 'u8[131072]{0}', space=vmem, size = 0x20000, scoped, tag = 'output window, operand 0, single buffered']
    %10 = vsyncpa [#allocation3], 0
    %11 = vsyncpa [#allocation6], 0
    %12 = vsyncpa [#allocation4], 0
    // Predicated region
    $region2: #{tpu_custom_call.1} parent=1 // pred_check
      _
    $region3: #{tpu_custom_call.1} parent=1 // pred_check_branch
      %14 = sbr.rel (0) target = $region5
    $region4: #{tpu_custom_call.1} parent=1 // pred_region
      %s16 = ssub.s32 1024, 1024
      %17 = vsyncadd [#allocation3], %s16
      %s18 = sshll.u32 [#allocation2], 4
      %s19 = int_to_ptr.vmem [resolvable:$true] %s18
      %24 = dma.hbm_to_vmem [thread:$0]  %s0, 1024, %s19, [#allocation3], 64, 64, 4
    $region5: #{tpu_custom_call.1} parent=1 // pred_fallthru
      _
    // Predicated region
    $region6: #{tpu_custom_call.1} parent=1 // pred_check
      _
    $region7: #{tpu_custom_call.1} parent=1 // pred_check_branch
      %26 = sbr.rel (0) target = $region9
    $region8: #{tpu_custom_call.1} parent=1 // pred_region
      %s28 = ssub.s32 2048, 2048
      %29 = vsyncadd [#allocation6], %s28
      %s30 = sshll.u32 [#allocation5], 4
      %s31 = int_to_ptr.vmem [resolvable:$true] %s30
      %36 = dma.hbm_to_vmem [thread:$0]  %s1, 2048, %s31, [#allocation6], 64, 64, 4
    $region9: #{tpu_custom_call.1} parent=1 // pred_fallthru
      _
    // Predicated region
    $region10: #{tpu_custom_call.1} parent=1 // pred_check
      _
    $region11: #{tpu_custom_call.1} parent=1 // pred_check_branch
      %38 = sbr.rel (0) target = $region13
    $region12: #{tpu_custom_call.1} parent=1 // pred_region
      _
    $region13: #{tpu_custom_call.1} parent=1 // pred_fallthru
      _
    // Predicated region
    $region14: #{tpu_custom_call.1} parent=1 // pred_check
      _
    $region15: #{tpu_custom_call.1} parent=1 // pred_check_branch
      %40 = sbr.rel (0) target = $region17
    $region16: #{tpu_custom_call.1} parent=1 // pred_region
      _
    $region17: #{tpu_custom_call.1} parent=1 // pred_fallthru
      _
    // Predicated region
    $region18: #{tpu_custom_call.1} parent=1 // pred_check
      _
    $region19: #{tpu_custom_call.1} parent=1 // pred_check_branch
      %42 = sbr.rel (0) target = $region21
    $region20: #{tpu_custom_call.1} parent=1 // pred_region
      _
    $region21: #{tpu_custom_call.1} parent=1 // pred_fallthru
      _
    // Predicated region
    $region22: #{tpu_custom_call.1} parent=1 // pred_check
      _
    $region23: #{tpu_custom_call.1} parent=1 // pred_check_branch
      %44 = sbr.rel (0) target = $region25
    $region24: #{tpu_custom_call.1} parent=1 // pred_region
      %45 = dma.done [#allocation3], 1024
    $region25: #{tpu_custom_call.1} parent=1 // pred_fallthru
      _
    // Predicated region
    $region26: #{tpu_custom_call.1} parent=1 // pred_check
      _
    $region27: #{tpu_custom_call.1} parent=1 // pred_check_branch
      %47 = sbr.rel (0) target = $region29
    $region28: #{tpu_custom_call.1} parent=1 // pred_region
      %48 = dma.done [#allocation6], 2048
    $region29: #{tpu_custom_call.1} parent=1 // pred_fallthru
      _
    %v50 = vld [vmem:[#allocation2] sm:$0xf]
    %v51 = vld [vmem:[#allocation2 + $0x4] sm:$0xf]
    %v52 = vld [vmem:[#allocation2 + $0x8] sm:$0xf]
    %v53 = vld [vmem:[#allocation2 + $0xc] sm:$0xf]
    %v54 = vld [vmem:[#allocation2 + $0x10] sm:$0xf]
    %v55 = vld [vmem:[#allocation2 + $0x14] sm:$0xf]
    %v56 = vld [vmem:[#allocation2 + $0x18] sm:$0xf]
    %v57 = vld [vmem:[#allocation2 + $0x1c] sm:$0xf]
    %v58 = vld [vmem:[#allocation2 + $0x20] sm:$0xf]
    %v59 = vld [vmem:[#allocation2 + $0x24] sm:$0xf]
    %v60 = vld [vmem:[#allocation2 + $0x28] sm:$0xf]
    %v61 = vld [vmem:[#allocation2 + $0x2c] sm:$0xf]
    %v62 = vld [vmem:[#allocation2 + $0x30] sm:$0xf]
    %v63 = vld [vmem:[#allocation2 + $0x34] sm:$0xf]
    %v64 = vld [vmem:[#allocation2 + $0x38] sm:$0xf]
    %v65 = vld [vmem:[#allocation2 + $0x3c] sm:$0xf]
    %v66 = vld [vmem:[%s2] sm:$0x1]
    %v67 = vld [vmem:[#allocation5] sm:$0xf]
    %v68 = vld [vmem:[#allocation5 + $0x4] sm:$0xf]
    %v69 = vld [vmem:[#allocation5 + $0x8] sm:$0xf]
    %v70 = vld [vmem:[#allocation5 + $0xc] sm:$0xf]
    %v71 = vld [vmem:[#allocation5 + $0x10] sm:$0xf]
    %v72 = vld [vmem:[#allocation5 + $0x14] sm:$0xf]
    %v73 = vld [vmem:[#allocation5 + $0x18] sm:$0xf]
    %v74 = vld [vmem:[#allocation5 + $0x1c] sm:$0xf]
    %v75 = vld [vmem:[#allocation5 + $0x20] sm:$0xf]
    %v76 = vld [vmem:[#allocation5 + $0x24] sm:$0xf]
    %v77 = vld [vmem:[#allocation5 + $0x28] sm:$0xf]
    %v78 = vld [vmem:[#allocation5 + $0x2c] sm:$0xf]
    %v79 = vld [vmem:[#allocation5 + $0x30] sm:$0xf]
    %v80 = vld [vmem:[#allocation5 + $0x34] sm:$0xf]
    %v81 = vld [vmem:[#allocation5 + $0x38] sm:$0xf]
    %v82 = vld [vmem:[#allocation5 + $0x3c] sm:$0xf]
    %v84 = vlaneseq
    %v85 = vshrl.u32 %v84, 7
    %v86 = vsub.s32 0, %v85
    %v87 = vrot.slane %v66, %v86
    %v105 = vunpack.c.l.b16 %v50
    %v106 = vunpack.c.l.b16 %v51
    %v107 = vunpack.c.l.b16 %v52
    %v108 = vunpack.c.l.b16 %v53
    %v109 = vunpack.c.l.b16 %v54
    %v110 = vunpack.c.l.b16 %v55
    %v111 = vunpack.c.l.b16 %v56
    %v112 = vunpack.c.l.b16 %v57
    %v113 = vunpack.c.l.b16 %v58
    %v114 = vunpack.c.l.b16 %v59
    %v115 = vunpack.c.l.b16 %v60
    %v116 = vunpack.c.l.b16 %v61
    %v117 = vunpack.c.l.b16 %v62
    %v118 = vunpack.c.l.b16 %v63
    %v119 = vunpack.c.l.b16 %v64
    %v120 = vunpack.c.l.b16 %v65
    %v121 = vpack.c.b16 %v106, %v105
    %v122 = vpack.c.b16 %v108, %v107
    %v123 = vpack.c.b16 %v110, %v109
    %v124 = vpack.c.b16 %v112, %v111
    %v125 = vpack.c.b16 %v114, %v113
    %v126 = vpack.c.b16 %v116, %v115
    %v127 = vpack.c.b16 %v118, %v117
    %v128 = vpack.c.b16 %v120, %v119
    %v153 = vunpack.c.l.b16 %v67
    %v154 = vunpack.c.l.b16 %v68
    %v155 = vunpack.c.l.b16 %v69
    %v156 = vunpack.c.l.b16 %v70
    %v157 = vunpack.c.l.b16 %v71
    %v158 = vunpack.c.l.b16 %v72
    %v159 = vunpack.c.l.b16 %v73
    %v160 = vunpack.c.l.b16 %v74
    %v161 = vunpack.c.l.b16 %v75
    %v162 = vunpack.c.l.b16 %v76
    %v163 = vunpack.c.l.b16 %v77
    %v164 = vunpack.c.l.b16 %v78
    %v165 = vunpack.c.l.b16 %v79
    %v166 = vunpack.c.l.b16 %v80
    %v167 = vunpack.c.l.b16 %v81
    %v168 = vunpack.c.l.b16 %v82
    %v169 = vpack.c.b16 %v154, %v153
    %v170 = vpack.c.b16 %v156, %v155
    %v171 = vpack.c.b16 %v158, %v157
    %v172 = vpack.c.b16 %v160, %v159
    %v173 = vpack.c.b16 %v162, %v161
    %v174 = vpack.c.b16 %v164, %v163
    %v175 = vpack.c.b16 %v166, %v165
    %v176 = vpack.c.b16 %v168, %v167
    %185 = vmatprep.subr.bf16.mxu0 0
    %186 = vmatpush1.bf16.msra.mxu0 %v169
    %187 = vmatprep.subr.bf16.mxu0 0
    %188 = vmatpush1.bf16.msra.mxu0 %v170
    %189 = vmatprep.subr.bf16.mxu0 0
    %190 = vmatpush1.bf16.msra.mxu0 %v171
    %191 = vmatprep.subr.bf16.mxu0 0
    %192 = vmatpush1.bf16.msra.mxu0 %v172
    %193 = vmatprep.subr.bf16.mxu0 0
    %194 = vmatpush1.bf16.msra.mxu0 %v173
    %195 = vmatprep.subr.bf16.mxu0 0
    %196 = vmatpush1.bf16.msra.mxu0 %v174
    %197 = vmatprep.subr.bf16.mxu0 0
    %198 = vmatpush1.bf16.msra.mxu0 %v175
    %199 = vmatprep.subr.bf16.mxu0 0
    %200 = vmatpush1.bf16.msra.mxu0 %v176
    %201 = vmatprep.subr.bf16.mxu0 0
    %202 = vmatpush1.bf16.msra.mxu0 0
    %203 = vmatprep.subr.bf16.mxu0 0
    %204 = vmatpush1.bf16.msra.mxu0 0
    %205 = vmatprep.subr.bf16.mxu0 0
    %206 = vmatpush1.bf16.msra.mxu0 0
    %207 = vmatprep.subr.bf16.mxu0 0
    %208 = vmatpush1.bf16.msra.mxu0 0
    %209 = vmatprep.subr.bf16.mxu0 0
    %210 = vmatpush1.bf16.msra.mxu0 0
    %211 = vmatprep.subr.bf16.mxu0 0
    %212 = vmatpush1.bf16.msra.mxu0 0
    %213 = vmatprep.subr.bf16.mxu0 0
    %214 = vmatpush1.bf16.msra.mxu0 0
    %215 = vmatprep.subr.bf16.mxu0 0
    %216 = vmatpush1.bf16.msra.mxu0 0
    %217 = vmatprep.mubr.bf16.mxu0 0
    %218 = vmatmul.mubr.bf16.gmra.mrb[0].mxu0 %v121
    %v219 = vpop.f32.mrb[0].mxu0
    %v220 = vadd.f32 %v87, %v219
    %v221 = vpop.f32.mrb[0].mxu0
    %v222 = vpop.f32.mrb[0].mxu0
    %v223 = vadd.f32 %v87, %v222
    %v224 = vpop.f32.mrb[0].mxu0
    %225 = vmatprep.mubr.bf16.mxu0 0
    %226 = vmatmul.mubr.bf16.gmra.mrb[0].mxu0 %v122
    %v227 = vpop.f32.mrb[0].mxu0
    %v228 = vadd.f32 %v87, %v227
    %v229 = vpop.f32.mrb[0].mxu0
    %v230 = vpop.f32.mrb[0].mxu0
    %v231 = vadd.f32 %v87, %v230
    %v232 = vpop.f32.mrb[0].mxu0
    %233 = vmatprep.mubr.bf16.mxu0 0
    %234 = vmatmul.mubr.bf16.gmra.mrb[0].mxu0 %v123
    %v235 = vpop.f32.mrb[0].mxu0
    %v236 = vadd.f32 %v87, %v235
    %v237 = vpop.f32.mrb[0].mxu0
    %v238 = vpop.f32.mrb[0].mxu0
    %v239 = vadd.f32 %v87, %v238
    %v240 = vpop.f32.mrb[0].mxu0
    %241 = vmatprep.mubr.bf16.mxu0 0
    %242 = vmatmul.mubr.bf16.gmra.mrb[0].mxu0 %v124
    %v243 = vpop.f32.mrb[0].mxu0
    %v244 = vadd.f32 %v87, %v243
    %v245 = vpop.f32.mrb[0].mxu0
    %v246 = vpop.f32.mrb[0].mxu0
    %v247 = vadd.f32 %v87, %v246
    %v248 = vpop.f32.mrb[0].mxu0
    %249 = vmatprep.mubr.bf16.mxu0 0
    %250 = vmatmul.mubr.bf16.gmra.mrb[0].mxu0 %v125
    %v251 = vpop.f32.mrb[0].mxu0
    %v252 = vadd.f32 %v87, %v251
    %v253 = vpop.f32.mrb[0].mxu0
    %v254 = vpop.f32.mrb[0].mxu0
    %v255 = vadd.f32 %v87, %v254
    %v256 = vpop.f32.mrb[0].mxu0
    %257 = vmatprep.mubr.bf16.mxu0 0
    %258 = vmatmul.mubr.bf16.gmra.mrb[0].mxu0 %v126
    %v259 = vpop.f32.mrb[0].mxu0
    %v260 = vadd.f32 %v87, %v259
    %v261 = vpop.f32.mrb[0].mxu0
    %v262 = vpop.f32.mrb[0].mxu0
    %v263 = vadd.f32 %v87, %v262
    %v264 = vpop.f32.mrb[0].mxu0
    %265 = vmatprep.mubr.bf16.mxu0 0
    %266 = vmatmul.mubr.bf16.gmra.mrb[0].mxu0 %v127
    %v267 = vpop.f32.mrb[0].mxu0
    %v268 = vadd.f32 %v87, %v267
    %v269 = vpop.f32.mrb[0].mxu0
    %v270 = vpop.f32.mrb[0].mxu0
    %v271 = vadd.f32 %v87, %v270
    %v272 = vpop.f32.mrb[0].mxu0
    %273 = vmatprep.mubr.bf16.mxu0 0
    %274 = vmatmul.mubr.bf16.gmra.mrb[0].mxu0 %v128
    %v275 = vpop.f32.mrb[0].mxu0
    %v276 = vadd.f32 %v87, %v275
    %v277 = vpop.f32.mrb[0].mxu0
    %v278 = vpop.f32.mrb[0].mxu0
    %v279 = vadd.f32 %v87, %v278
    %v280 = vpop.f32.mrb[0].mxu0
    %281 = vdwg.mxu0
    %s282 = scalar_lea.vmem [#allocation5], 64
    %v283 = vld [vmem:[%s282] sm:$0xf]
    %v284 = vld [vmem:[%s282 + $0x4] sm:$0xf]
    %v285 = vld [vmem:[%s282 + $0x8] sm:$0xf]
    %v286 = vld [vmem:[%s282 + $0xc] sm:$0xf]
    %v287 = vld [vmem:[%s282 + $0x10] sm:$0xf]
    %v288 = vld [vmem:[%s282 + $0x14] sm:$0xf]
    %v289 = vld [vmem:[%s282 + $0x18] sm:$0xf]
    %v290 = vld [vmem:[%s282 + $0x1c] sm:$0xf]
    %v291 = vld [vmem:[%s282 + $0x20] sm:$0xf]
    %v292 = vld [vmem:[%s282 + $0x24] sm:$0xf]
    %v293 = vld [vmem:[%s282 + $0x28] sm:$0xf]
    %v294 = vld [vmem:[%s282 + $0x2c] sm:$0xf]
    %v295 = vld [vmem:[%s282 + $0x30] sm:$0xf]
    %v296 = vld [vmem:[%s282 + $0x34] sm:$0xf]
    %v297 = vld [vmem:[%s282 + $0x38] sm:$0xf]
    %v298 = vld [vmem:[%s282 + $0x3c] sm:$0xf]
    %v315 = vunpack.c.l.b16 %v283
    %v316 = vunpack.c.l.b16 %v284
    %v317 = vunpack.c.l.b16 %v285
    %v318 = vunpack.c.l.b16 %v286
    %v319 = vunpack.c.l.b16 %v287
    %v320 = vunpack.c.l.b16 %v288
    %v321 = vunpack.c.l.b16 %v289
    %v322 = vunpack.c.l.b16 %v290
    %v323 = vunpack.c.l.b16 %v291
    %v324 = vunpack.c.l.b16 %v292
    %v325 = vunpack.c.l.b16 %v293
    %v326 = vunpack.c.l.b16 %v294
    %v327 = vunpack.c.l.b16 %v295
    %v328 = vunpack.c.l.b16 %v296
    %v329 = vunpack.c.l.b16 %v297
    %v330 = vunpack.c.l.b16 %v298
    %v331 = vpack.c.b16 %v316, %v315
    %v332 = vpack.c.b16 %v318, %v317
    %v333 = vpack.c.b16 %v320, %v319
    %v334 = vpack.c.b16 %v322, %v321
    %v335 = vpack.c.b16 %v324, %v323
    %v336 = vpack.c.b16 %v326, %v325
    %v337 = vpack.c.b16 %v328, %v327
    %v338 = vpack.c.b16 %v330, %v329
    %347 = vmatprep.subr.bf16.mxu0 0
    %348 = vmatpush1.bf16.msra.mxu0 %v331
    %349 = vmatprep.subr.bf16.mxu0 0
    %350 = vmatpush1.bf16.msra.mxu0 %v332
    %351 = vmatprep.subr.bf16.mxu0 0
    %352 = vmatpush1.bf16.msra.mxu0 %v333
    %353 = vmatprep.subr.bf16.mxu0 0
    %354 = vmatpush1.bf16.msra.mxu0 %v334
    %355 = vmatprep.subr.bf16.mxu0 0
    %356 = vmatpush1.bf16.msra.mxu0 %v335
    %357 = vmatprep.subr.bf16.mxu0 0
    %358 = vmatpush1.bf16.msra.mxu0 %v336
    %359 = vmatprep.subr.bf16.mxu0 0
    %360 = vmatpush1.bf16.msra.mxu0 %v337
    %361 = vmatprep.subr.bf16.mxu0 0
    %362 = vmatpush1.bf16.msra.mxu0 %v338
    %363 = vmatprep.subr.bf16.mxu0 0
    %364 = vmatpush1.bf16.msra.mxu0 0
    %365 = vmatprep.subr.bf16.mxu0 0
    %366 = vmatpush1.bf16.msra.mxu0 0
    %367 = vmatprep.subr.bf16.mxu0 0
    %368 = vmatpush1.bf16.msra.mxu0 0
    %369 = vmatprep.subr.bf16.mxu0 0
    %370 = vmatpush1.bf16.msra.mxu0 0
    %371 = vmatprep.subr.bf16.mxu0 0
    %372 = vmatpush1.bf16.msra.mxu0 0
    %373 = vmatprep.subr.bf16.mxu0 0
    %374 = vmatpush1.bf16.msra.mxu0 0
    %375 = vmatprep.subr.bf16.mxu0 0
    %376 = vmatpush1.bf16.msra.mxu0 0
    %377 = vmatprep.subr.bf16.mxu0 0
    %378 = vmatpush1.bf16.msra.mxu0 0
    %379 = vmatprep.mubr.bf16.mxu0 0
    %380 = vmatmul.mubr.bf16.gmra.mrb[0].mxu0 %v121
    %v381 = vpop.f32.mrb[0].mxu0
    %v382 = vadd.f32 %v87, %v381
    %v383 = vpop.f32.mrb[0].mxu0
    %v384 = vpop.f32.mrb[0].mxu0
    %v385 = vadd.f32 %v87, %v384
    %v386 = vpop.f32.mrb[0].mxu0
    %387 = vmatprep.mubr.bf16.mxu0 0
    %388 = vmatmul.mubr.bf16.gmra.mrb[0].mxu0 %v122
    %v389 = vpop.f32.mrb[0].mxu0
    %v390 = vadd.f32 %v87, %v389
    %v391 = vpop.f32.mrb[0].mxu0
    %v392 = vpop.f32.mrb[0].mxu0
    %v393 = vadd.f32 %v87, %v392
    %v394 = vpop.f32.mrb[0].mxu0
    %395 = vmatprep.mubr.bf16.mxu0 0
    %396 = vmatmul.mubr.bf16.gmra.mrb[0].mxu0 %v123
    %v397 = vpop.f32.mrb[0].mxu0
    %v398 = vadd.f32 %v87, %v397
    %v399 = vpop.f32.mrb[0].mxu0
    %v400 = vpop.f32.mrb[0].mxu0
    %v401 = vadd.f32 %v87, %v400
    %v402 = vpop.f32.mrb[0].mxu0
    %403 = vmatprep.mubr.bf16.mxu0 0
    %404 = vmatmul.mubr.bf16.gmra.mrb[0].mxu0 %v124
    %v405 = vpop.f32.mrb[0].mxu0
    %v406 = vadd.f32 %v87, %v405
    %v407 = vpop.f32.mrb[0].mxu0
    %v408 = vpop.f32.mrb[0].mxu0
    %v409 = vadd.f32 %v87, %v408
    %v410 = vpop.f32.mrb[0].mxu0
    %411 = vmatprep.mubr.bf16.mxu0 0
    %412 = vmatmul.mubr.bf16.gmra.mrb[0].mxu0 %v125
    %v413 = vpop.f32.mrb[0].mxu0
    %v414 = vadd.f32 %v87, %v413
    %v415 = vpop.f32.mrb[0].mxu0
    %v416 = vpop.f32.mrb[0].mxu0
    %v417 = vadd.f32 %v87, %v416
    %v418 = vpop.f32.mrb[0].mxu0
    %419 = vmatprep.mubr.bf16.mxu0 0
    %420 = vmatmul.mubr.bf16.gmra.mrb[0].mxu0 %v126
    %v421 = vpop.f32.mrb[0].mxu0
    %v422 = vadd.f32 %v87, %v421
    %v423 = vpop.f32.mrb[0].mxu0
    %v424 = vpop.f32.mrb[0].mxu0
    %v425 = vadd.f32 %v87, %v424
    %v426 = vpop.f32.mrb[0].mxu0
    %427 = vmatprep.mubr.bf16.mxu0 0
    %428 = vmatmul.mubr.bf16.gmra.mrb[0].mxu0 %v127
    %v429 = vpop.f32.mrb[0].mxu0
    %v430 = vadd.f32 %v87, %v429
    %v431 = vpop.f32.mrb[0].mxu0
    %v432 = vpop.f32.mrb[0].mxu0
    %v433 = vadd.f32 %v87, %v432
    %v434 = vpop.f32.mrb[0].mxu0
    %435 = vmatprep.mubr.bf16.mxu0 0
    %436 = vmatmul.mubr.bf16.gmra.mrb[0].mxu0 %v128
    %v437 = vpop.f32.mrb[0].mxu0
    %v438 = vadd.f32 %v87, %v437
    %v439 = vpop.f32.mrb[0].mxu0
    %v440 = vpop.f32.mrb[0].mxu0
    %v441 = vadd.f32 %v87, %v440
    %v442 = vpop.f32.mrb[0].mxu0
    %443 = vdwg.mxu0
    %v444 = vadd.f32 %v220, %v223
    %v445 = vadd.f32 %v444, %v228
    %v446 = vadd.f32 %v445, %v231
    %v447 = vadd.f32 %v446, %v236
    %v448 = vadd.f32 %v447, %v239
    %v449 = vadd.f32 %v448, %v244
    %v450 = vadd.f32 %v449, %v247
    %v451 = vadd.f32 %v450, %v252
    %v452 = vadd.f32 %v451, %v255
    %v453 = vadd.f32 %v452, %v260
    %v454 = vadd.f32 %v453, %v263
    %v455 = vadd.f32 %v454, %v268
    %v456 = vadd.f32 %v455, %v271
    %v457 = vadd.f32 %v456, %v276
    %v458 = vadd.f32 %v457, %v279
    %v459 = vrot.slane %v458, 4
    %v460 = vadd.f32 %v458, %v459
    %v461 = vrot.slane %v460, 2
    %v462 = vadd.f32 %v460, %v461
    %v463 = vrot.slane %v462, 1
    %v464 = vadd.f32 %v462, %v463
    %v465 = vadd.f32 %v382, %v385
    %v466 = vadd.f32 %v465, %v390
    %v467 = vadd.f32 %v466, %v393
    %v468 = vadd.f32 %v467, %v398
    %v469 = vadd.f32 %v468, %v401
    %v470 = vadd.f32 %v469, %v406
    %v471 = vadd.f32 %v470, %v409
    %v472 = vadd.f32 %v471, %v414
    %v473 = vadd.f32 %v472, %v417
    %v474 = vadd.f32 %v473, %v422
    %v475 = vadd.f32 %v474, %v425
    %v476 = vadd.f32 %v475, %v430
    %v477 = vadd.f32 %v476, %v433
    %v478 = vadd.f32 %v477, %v438
    %v479 = vadd.f32 %v478, %v441
    %v480 = vrot.slane %v479, 4
    %v481 = vadd.f32 %v479, %v480
    %v482 = vrot.slane %v481, 2
    %v483 = vadd.f32 %v481, %v482
    %v484 = vrot.slane %v483, 1
    %v485 = vadd.f32 %v483, %v484
    %v486 = vadd.f32 %v464, %v485
    %488 = vrot.lane.b32.xlu0 %v486, 64
    %v489 = vpop.permute.xlu0 %488
    %v491 = vadd.f32 %v486, %v489
    %v492 = vmul.f32 %v491, 0.001953125
    %494 = vrot.lane.b32.xlu0 %v492, 64
    %v495 = vpop.permute.xlu0 %494
    %vm497 = vcmask 523264
    %v498 = vsel %vm497, %v492, %v495
    %v499 = vlaneseq
    %v500 = vshrl.u32 %v499, 7
    %v501 = vsub.s32 0, %v500
    %v502 = vrot.slane %v498, %v501
    %v503 = vsub.f32 %v220, %v502
    %v504 = vsub.f32 %v223, %v502
    %v505 = vsub.f32 %v228, %v502
    %v506 = vsub.f32 %v231, %v502
    %v507 = vsub.f32 %v236, %v502
    %v508 = vsub.f32 %v239, %v502
    %v509 = vsub.f32 %v244, %v502
    %v510 = vsub.f32 %v247, %v502
    %v511 = vsub.f32 %v252, %v502
    %v512 = vsub.f32 %v255, %v502
    %v513 = vsub.f32 %v260, %v502
    %v514 = vsub.f32 %v263, %v502
    %v515 = vsub.f32 %v268, %v502
    %v516 = vsub.f32 %v271, %v502
    %v517 = vsub.f32 %v276, %v502
    %v518 = vsub.f32 %v279, %v502
    %v519 = vsub.f32 %v382, %v502
    %v520 = vsub.f32 %v385, %v502
    %v521 = vsub.f32 %v390, %v502
    %v522 = vsub.f32 %v393, %v502
    %v523 = vsub.f32 %v398, %v502
    %v524 = vsub.f32 %v401, %v502
    %v525 = vsub.f32 %v406, %v502
    %v526 = vsub.f32 %v409, %v502
    %v527 = vsub.f32 %v414, %v502
    %v528 = vsub.f32 %v417, %v502
    %v529 = vsub.f32 %v422, %v502
    %v530 = vsub.f32 %v425, %v502
    %v531 = vsub.f32 %v430, %v502
    %v532 = vsub.f32 %v433, %v502
    %v533 = vsub.f32 %v438, %v502
    %v534 = vsub.f32 %v441, %v502
    %v535 = vmul.f32 %v503, %v503
    %v536 = vmul.f32 %v504, %v504
    %v537 = vmul.f32 %v505, %v505
    %v538 = vmul.f32 %v506, %v506
    %v539 = vmul.f32 %v507, %v507
    %v540 = vmul.f32 %v508, %v508
    %v541 = vmul.f32 %v509, %v509
    %v542 = vmul.f32 %v510, %v510
    %v543 = vmul.f32 %v511, %v511
    %v544 = vmul.f32 %v512, %v512
    %v545 = vmul.f32 %v513, %v513
    %v546 = vmul.f32 %v514, %v514
    %v547 = vmul.f32 %v515, %v515
    %v548 = vmul.f32 %v516, %v516
    %v549 = vmul.f32 %v517, %v517
    %v550 = vmul.f32 %v518, %v518
    %v551 = vadd.f32 %v535, %v536
    %v552 = vadd.f32 %v551, %v537
    %v553 = vadd.f32 %v552, %v538
    %v554 = vadd.f32 %v553, %v539
    %v555 = vadd.f32 %v554, %v540
    %v556 = vadd.f32 %v555, %v541
    %v557 = vadd.f32 %v556, %v542
    %v558 = vadd.f32 %v557, %v543
    %v559 = vadd.f32 %v558, %v544
    %v560 = vadd.f32 %v559, %v545
    %v561 = vadd.f32 %v560, %v546
    %v562 = vadd.f32 %v561, %v547
    %v563 = vadd.f32 %v562, %v548
    %v564 = vadd.f32 %v563, %v549
    %v565 = vadd.f32 %v564, %v550
    %v566 = vrot.slane %v565, 4
    %v567 = vadd.f32 %v565, %v566
    %v568 = vrot.slane %v567, 2
    %v569 = vadd.f32 %v567, %v568
    %v570 = vrot.slane %v569, 1
    %v571 = vadd.f32 %v569, %v570
    %v572 = vmul.f32 %v519, %v519
    %v573 = vmul.f32 %v520, %v520
    %v574 = vmul.f32 %v521, %v521
    %v575 = vmul.f32 %v522, %v522
    %v576 = vmul.f32 %v523, %v523
    %v577 = vmul.f32 %v524, %v524
    %v578 = vmul.f32 %v525, %v525
    %v579 = vmul.f32 %v526, %v526
    %v580 = vmul.f32 %v527, %v527
    %v581 = vmul.f32 %v528, %v528
    %v582 = vmul.f32 %v529, %v529
    %v583 = vmul.f32 %v530, %v530
    %v584 = vmul.f32 %v531, %v531
    %v585 = vmul.f32 %v532, %v532
    %v586 = vmul.f32 %v533, %v533
    %v587 = vmul.f32 %v534, %v534
    %v588 = vadd.f32 %v572, %v573
    %v589 = vadd.f32 %v588, %v574
    %v590 = vadd.f32 %v589, %v575
    %v591 = vadd.f32 %v590, %v576
    %v592 = vadd.f32 %v591, %v577
    %v593 = vadd.f32 %v592, %v578
    %v594 = vadd.f32 %v593, %v579
    %v595 = vadd.f32 %v594, %v580
    %v596 = vadd.f32 %v595, %v581
    %v597 = vadd.f32 %v596, %v582
    %v598 = vadd.f32 %v597, %v583
    %v599 = vadd.f32 %v598, %v584
    %v600 = vadd.f32 %v599, %v585
    %v601 = vadd.f32 %v600, %v586
    %v602 = vadd.f32 %v601, %v587
    %v603 = vrot.slane %v602, 4
    %v604 = vadd.f32 %v602, %v603
    %v605 = vrot.slane %v604, 2
    %v606 = vadd.f32 %v604, %v605
    %v607 = vrot.slane %v606, 1
    %v608 = vadd.f32 %v606, %v607
    %v609 = vadd.f32 %v571, %v608
    %611 = vrot.lane.b32.xlu0 %v609, 64
    %v612 = vpop.permute.xlu0 %611
    %v614 = vadd.f32 %v609, %v612
    %v615 = vmul.f32 %v614, 0.001953125
    %v616 = vld [vmem:[%s3] sm:$0x1]
    %v617 = vadd.f32 %v615, 1e-05
    %v618 = vrsqrt.pop %v617
    %v619 = vmul.f32 %v616, %v618
    %v621 = vlaneseq
    %v622 = vshrl.u32 %v621, 7
    %v623 = vsub.s32 0, %v622
    %v624 = vrot.slane %v619, %v623
    %625 = vrot.lane.b32.xlu0 %v624, 64
    %v626 = vpop.permute.xlu0 %625
    %v628 = vsel %vm497, %v619, %v626
    %v629 = vld [vmem:[%s4] sm:$0x1]
    %v631 = vlaneseq
    %v632 = vshrl.u32 %v631, 7
    %v633 = vsub.s32 0, %v632
    %v634 = vrot.slane %v629, %v633
    %635 = vrot.lane.b32.xlu0 %v634, 64
    %v636 = vpop.permute.xlu0 %635
    %v638 = vsel %vm497, %v629, %v636
    %v639 = vlaneseq
    %v640 = vshrl.u32 %v639, 7
    %v641 = vsub.s32 0, %v640
    %v642 = vrot.slane %v628, %v641
    %v643 = vmul.f32 %v503, %v642
    %v644 = vmul.f32 %v504, %v642
    %v645 = vmul.f32 %v505, %v642
    %v646 = vmul.f32 %v506, %v642
    %v647 = vmul.f32 %v507, %v642
    %v648 = vmul.f32 %v508, %v642
    %v649 = vmul.f32 %v509, %v642
    %v650 = vmul.f32 %v510, %v642
    %v651 = vmul.f32 %v511, %v642
    %v652 = vmul.f32 %v512, %v642
    %v653 = vmul.f32 %v513, %v642
    %v654 = vmul.f32 %v514, %v642
    %v655 = vmul.f32 %v515, %v642
    %v656 = vmul.f32 %v516, %v642
    %v657 = vmul.f32 %v517, %v642
    %v658 = vmul.f32 %v518, %v642
    %v659 = vlaneseq
    %v660 = vshrl.u32 %v659, 7
    %v661 = vsub.s32 0, %v660
    %v662 = vrot.slane %v638, %v661
    %v663 = vadd.f32 %v643, %v662
    %v664 = vadd.f32 %v644, %v662
    %v665 = vadd.f32 %v645, %v662
    %v666 = vadd.f32 %v646, %v662
    %v667 = vadd.f32 %v647, %v662
    %v668 = vadd.f32 %v648, %v662
    %v669 = vadd.f32 %v649, %v662
    %v670 = vadd.f32 %v650, %v662
    %v671 = vadd.f32 %v651, %v662
    %v672 = vadd.f32 %v652, %v662
    %v673 = vadd.f32 %v653, %v662
    %v674 = vadd.f32 %v654, %v662
    %v675 = vadd.f32 %v655, %v662
    %v676 = vadd.f32 %v656, %v662
    %v677 = vadd.f32 %v657, %v662
    %v678 = vadd.f32 %v658, %v662
    %v679 = vmax.f32 %v663, 0.0
    %v680 = vmax.f32 %v664, 0.0
    %v681 = vmax.f32 %v665, 0.0
    %v682 = vmax.f32 %v666, 0.0
    %v683 = vmax.f32 %v667, 0.0
    %v684 = vmax.f32 %v668, 0.0
    %v685 = vmax.f32 %v669, 0.0
    %v686 = vmax.f32 %v670, 0.0
    %v687 = vmax.f32 %v671, 0.0
    %v688 = vmax.f32 %v672, 0.0
    %v689 = vmax.f32 %v673, 0.0
    %v690 = vmax.f32 %v674, 0.0
    %v691 = vmax.f32 %v675, 0.0
    %v692 = vmax.f32 %v676, 0.0
    %v693 = vmax.f32 %v677, 0.0
    %v694 = vmax.f32 %v678, 0.0
    %v695 = vmul.f32 %v519, %v642
    %v696 = vmul.f32 %v520, %v642
    %v697 = vmul.f32 %v521, %v642
    %v698 = vmul.f32 %v522, %v642
    %v699 = vmul.f32 %v523, %v642
    %v700 = vmul.f32 %v524, %v642
    %v701 = vmul.f32 %v525, %v642
    %v702 = vmul.f32 %v526, %v642
    %v703 = vmul.f32 %v527, %v642
    %v704 = vmul.f32 %v528, %v642
    %v705 = vmul.f32 %v529, %v642
    %v706 = vmul.f32 %v530, %v642
    %v707 = vmul.f32 %v531, %v642
    %v708 = vmul.f32 %v532, %v642
    %v709 = vmul.f32 %v533, %v642
    %v710 = vmul.f32 %v534, %v642
    %v711 = vadd.f32 %v695, %v662
    %v712 = vadd.f32 %v696, %v662
    %v713 = vadd.f32 %v697, %v662
    %v714 = vadd.f32 %v698, %v662
    %v715 = vadd.f32 %v699, %v662
    %v716 = vadd.f32 %v700, %v662
    %v717 = vadd.f32 %v701, %v662
    %v718 = vadd.f32 %v702, %v662
    %v719 = vadd.f32 %v703, %v662
    %v720 = vadd.f32 %v704, %v662
    %v721 = vadd.f32 %v705, %v662
    %v722 = vadd.f32 %v706, %v662
    %v723 = vadd.f32 %v707, %v662
    %v724 = vadd.f32 %v708, %v662
    %v725 = vadd.f32 %v709, %v662
    %v726 = vadd.f32 %v710, %v662
    %v727 = vmax.f32 %v711, 0.0
    %v728 = vmax.f32 %v712, 0.0
    %v729 = vmax.f32 %v713, 0.0
    %v730 = vmax.f32 %v714, 0.0
    %v731 = vmax.f32 %v715, 0.0
    %v732 = vmax.f32 %v716, 0.0
    %v733 = vmax.f32 %v717, 0.0
    %v734 = vmax.f32 %v718, 0.0
    %v735 = vmax.f32 %v719, 0.0
    %v736 = vmax.f32 %v720, 0.0
    %v737 = vmax.f32 %v721, 0.0
    %v738 = vmax.f32 %v722, 0.0
    %v739 = vmax.f32 %v723, 0.0
    %v740 = vmax.f32 %v724, 0.0
    %v741 = vmax.f32 %v725, 0.0
    %v742 = vmax.f32 %v726, 0.0
    %743 = vst [vmem:[#allocation7] sm:$0xff] %v679
    %744 = vst [vmem:[#allocation7 + $0x10] sm:$0xff] %v680
    %745 = vst [vmem:[#allocation7 + $0x20] sm:$0xff] %v681
    %746 = vst [vmem:[#allocation7 + $0x30] sm:$0xff] %v682
    %747 = vst [vmem:[#allocation7 + $0x40] sm:$0xff] %v683
    %748 = vst [vmem:[#allocation7 + $0x50] sm:$0xff] %v684
    %749 = vst [vmem:[#allocation7 + $0x60] sm:$0xff] %v685
    %750 = vst [vmem:[#allocation7 + $0x70] sm:$0xff] %v686
    %751 = vst [vmem:[#allocation7 + $0x80] sm:$0xff] %v687
    %752 = vst [vmem:[#allocation7 + $0x90] sm:$0xff] %v688
    %753 = vst [vmem:[#allocation7 + $0xa0] sm:$0xff] %v689
    %754 = vst [vmem:[#allocation7 + $0xb0] sm:$0xff] %v690
    %755 = vst [vmem:[#allocation7 + $0xc0] sm:$0xff] %v691
    %756 = vst [vmem:[#allocation7 + $0xd0] sm:$0xff] %v692
    %757 = vst [vmem:[#allocation7 + $0xe0] sm:$0xff] %v693
    %758 = vst [vmem:[#allocation7 + $0xf0] sm:$0xff] %v694
    %s759 = scalar_lea.vmem [#allocation7], 8
    %760 = vst [vmem:[%s759] sm:$0xff] %v727
    %761 = vst [vmem:[%s759 + $0x10] sm:$0xff] %v728
    %762 = vst [vmem:[%s759 + $0x20] sm:$0xff] %v729
    %763 = vst [vmem:[%s759 + $0x30] sm:$0xff] %v730
    %764 = vst [vmem:[%s759 + $0x40] sm:$0xff] %v731
    %765 = vst [vmem:[%s759 + $0x50] sm:$0xff] %v732
    %766 = vst [vmem:[%s759 + $0x60] sm:$0xff] %v733
    %767 = vst [vmem:[%s759 + $0x70] sm:$0xff] %v734
    %768 = vst [vmem:[%s759 + $0x80] sm:$0xff] %v735
    %769 = vst [vmem:[%s759 + $0x90] sm:$0xff] %v736
    %770 = vst [vmem:[%s759 + $0xa0] sm:$0xff] %v737
    %771 = vst [vmem:[%s759 + $0xb0] sm:$0xff] %v738
    %772 = vst [vmem:[%s759 + $0xc0] sm:$0xff] %v739
    %773 = vst [vmem:[%s759 + $0xd0] sm:$0xff] %v740
    %774 = vst [vmem:[%s759 + $0xe0] sm:$0xff] %v741
    %775 = vst [vmem:[%s759 + $0xf0] sm:$0xff] %v742
    // Predicated region
    $region30: #{tpu_custom_call.1} parent=1 // pred_check
      _
    $region31: #{tpu_custom_call.1} parent=1 // pred_check_branch
      %777 = sbr.rel (0) target = $region33
    $region32: #{tpu_custom_call.1} parent=1 // pred_region
      %s779 = ssub.s32 4096, 4096
      %780 = vsyncadd [#allocation4], %s779
      %s781 = sshll.u32 [#allocation7], 4
      %s782 = int_to_ptr.vmem [resolvable:$true] %s781
      %787 = dma.vmem_to_hbm [thread:$0]  %s782, 4096, %s5, [#allocation4], 128, 128, 8
    $region33: #{tpu_custom_call.1} parent=1 // pred_fallthru
      _
    // Predicated region
    $region34: #{tpu_custom_call.1} parent=1 // pred_check
      _
    $region35: #{tpu_custom_call.1} parent=1 // pred_check_branch
      %789 = sbr.rel (0) target = $region37
    $region36: #{tpu_custom_call.1} parent=1 // pred_region
      %790 = dma.done [#allocation4], 4096
    $region37: #{tpu_custom_call.1} parent=1 // pred_fallthru
      _
    %791 = vsyncpa [#allocation3], 1
    %792 = vsyncpa [#allocation6], 1
    %793 = vsyncpa [#allocation4], 1

</llo_original>
